<compile_context>
chip_gen: v6e
topology: v6e:2x2x1
jax: 0.10.0
libtpu: 0.0.40
codegen_flags: <defaults>
</compile_context>

<pallas_src>
import functools

import jax
import jax.numpy as jnp
from jax.experimental import pallas as pl
from jax.experimental.pallas import tpu as pltpu


# ---------------------------------------------------------------------------
# Fused MLP kernel: (x_ref, w0, b0, w1, b1, ..., o_ref)
# Every layer's matmul + bias + ReLU runs on the same VMEM-resident batch tile.
# ---------------------------------------------------------------------------
def _make_mlp_kernel(n_layers):
    def kernel(*refs):
        x_ref = refs[0]
        o_ref = refs[-1]
        p = refs[1:-1]                       # alternating (w, b) refs
        h = x_ref[...]                       # (TB, in_dim) f32
        for i in range(n_layers):
            w = p[2 * i][...]                # (d_in, d_out), lane-dense output
            b = p[2 * i + 1][...]            # (1, d_out)
            h = jnp.dot(h, w, preferred_element_type=jnp.float32) + b
            if i < n_layers - 1:             # last LinearBlock has no activation
                h = jnp.maximum(h, 0.0)      # ReLU
        o_ref[...] = h.astype(o_ref.dtype)
    return kernel


def mlp_forward(x, params, *, block_batch=128):
    """MLP forward.

    x      : (N, ...)   flattened to (N, input_dim) like x.view(N, -1)
    params : list of (W, b) per LinearBlock, W in PyTorch layout (out, in)
    """
    N = x.shape[0]
    x2 = x.reshape(N, -1).astype(jnp.float32)
    in_dim = x2.shape[1]
    n_layers = len(params)
    out_dim = params[-1][0].shape[0]

    # Pre-transpose weights to (in, out); biases as (1, out) rows.
    flat_params = []
    for (w, b) in params:
        flat_params.append(jnp.asarray(w, jnp.float32).T)
        flat_params.append(jnp.asarray(b, jnp.float32).reshape(1, -1))

    # Batch tiling: sublane (second-minor) block dim must be a multiple of 8,
    # so pad the batch and tile it with a parallel grid.
    if N >= block_batch:
        tb = block_batch
    else:
        tb = max(8, ((N + 7) // 8) * 8)
    n_tiles = pl.cdiv(N, tb)
    n_pad = n_tiles * tb
    if n_pad != N:
        x2 = jnp.pad(x2, ((0, n_pad - N), (0, 0)))

    in_specs = [pl.BlockSpec((tb, in_dim), lambda i: (i, 0))]
    for arr in flat_params:
        # Full-extent blocks, constant index_map -> fetched once, VMEM-resident.
        in_specs.append(pl.BlockSpec(arr.shape, lambda i: (0, 0)))

    out = pl.pallas_call(
        _make_mlp_kernel(n_layers),
        out_shape=jax.ShapeDtypeStruct((n_pad, out_dim), jnp.float32),
        grid_spec=pltpu.PrefetchScalarGridSpec(
            num_scalar_prefetch=0,
            grid=(n_tiles,),
            in_specs=in_specs,
            out_specs=pl.BlockSpec((tb, out_dim), lambda i: (i, 0)),
        ),
        compiler_params=pltpu.CompilerParams(
            dimension_semantics=("parallel",),
        ),
    )(x2, *flat_params)
    return out[:N]


# ---------------------------------------------------------------------------
# Pure-JAX reference (for correctness check)
# ---------------------------------------------------------------------------
def _ref_mlp(x, params):
    N = x.shape[0]
    h = x.reshape(N, -1).astype(jnp.float32)
    for idx, (w, b) in enumerate(params):
        h = h @ w.T + b
        if idx < len(params) - 1:
            h = jnp.maximum(h, 0.0)
    return h


# ---------------------------------------------------------------------------
if __name__ == "__main__":
    # MLP(input_dim=32, output_dim=8, dim=64, n_blk=3, norm='none', activ='relu')
    batch = 2
    input_dim = 32
    hidden_dim = 64
    output_dim = 8
    n_blk = 3

    key = jax.random.PRNGKey(0)
    kx, kp = jax.random.split(key)
    x = jax.random.normal(kx, (batch, input_dim), dtype=jnp.float32)

    # Deterministic parameter init mirroring n_blk nn.Linear layers.
    in_dims = [input_dim] + [hidden_dim] * (n_blk - 1)
    out_dims = [hidden_dim] * (n_blk - 1) + [output_dim]
    pkeys = jax.random.split(kp, n_blk)
    params = []
    for i in range(n_blk):
        fan_in = in_dims[i]
        scale = 1.0 / jnp.sqrt(jnp.float32(fan_in))
        w = jax.random.normal(pkeys[i], (out_dims[i], in_dims[i]), jnp.float32) * scale
        b = jnp.linspace(-0.1, 0.1, out_dims[i], dtype=jnp.float32)
        params.append((w, b))

    fwd = jax.jit(functools.partial(mlp_forward, params=params))
    out = jax.block_until_ready(fwd(x))

    ref = jax.block_until_ready(_ref_mlp(x, params))
    assert out.shape == (batch, output_dim), out.shape
    assert jnp.allclose(out, ref, rtol=1e-3, atol=1e-3), float(jnp.abs(out - ref).max())

    print("KERNEL_OK")
</pallas_src>

<mosaic_0001>
module attributes {stable_mosaic.version = 11 : i64} {
  func.func @kernel(%arg0: i32, %arg1: memref<8x32xf32, #tpu.memory_space<vmem>>, %arg2: memref<32x64xf32, #tpu.memory_space<vmem>>, %arg3: memref<1x64xf32, #tpu.memory_space<vmem>>, %arg4: memref<64x64xf32, #tpu.memory_space<vmem>>, %arg5: memref<1x64xf32, #tpu.memory_space<vmem>>, %arg6: memref<64x8xf32, #tpu.memory_space<vmem>>, %arg7: memref<1x8xf32, #tpu.memory_space<vmem>>, %arg8: memref<8x8xf32, #tpu.memory_space<vmem>>) attributes {dimension_semantics = [#tpu.dimension_semantics<parallel>], iteration_bounds = array<i64: 1>, scalar_prefetch = 0 : i64, scratch_operands = 0 : i64, tpu.core_type = #tpu.core_type<tc>, window_params = [{transform_indices = @transform_0, window_bounds = array<i64: 8, 32>}, {pipeline_mode = #tpu.pipeline_mode<synchronous>, transform_indices = @transform_1, window_bounds = array<i64: 32, 64>}, {pipeline_mode = #tpu.pipeline_mode<synchronous>, transform_indices = @transform_2, window_bounds = array<i64: 1, 64>}, {pipeline_mode = #tpu.pipeline_mode<synchronous>, transform_indices = @transform_3, window_bounds = array<i64: 64, 64>}, {pipeline_mode = #tpu.pipeline_mode<synchronous>, transform_indices = @transform_4, window_bounds = array<i64: 1, 64>}, {pipeline_mode = #tpu.pipeline_mode<synchronous>, transform_indices = @transform_5, window_bounds = array<i64: 64, 8>}, {pipeline_mode = #tpu.pipeline_mode<synchronous>, transform_indices = @transform_6, window_bounds = array<i64: 1, 8>}, {transform_indices = @transform_7, window_bounds = array<i64: 8, 8>}]} {
    %c0 = arith.constant 0 : index
    %c0_0 = arith.constant 0 : index
    %0 = vector.load %arg1[%c0, %c0_0] : memref<8x32xf32, #tpu.memory_space<vmem>>, vector<8x32xf32>
    %c0_1 = arith.constant 0 : index
    %c0_2 = arith.constant 0 : index
    %1 = vector.load %arg2[%c0_1, %c0_2] : memref<32x64xf32, #tpu.memory_space<vmem>>, vector<32x64xf32>
    %c0_3 = arith.constant 0 : index
    %c0_4 = arith.constant 0 : index
    %2 = vector.load %arg3[%c0_3, %c0_4] : memref<1x64xf32, #tpu.memory_space<vmem>>, vector<1x64xf32>
    %cst = arith.constant dense<0.000000e+00> : vector<8x64xf32>
    %3 = tpu.matmul %0, %1, %cst {dimension_numbers = #tpu.dot_dimension_numbers<[1], [0], [0], [1], [0, 0, 1, 1], [], []>} : vector<8x32xf32>, vector<32x64xf32>, vector<8x64xf32> -> vector<8x64xf32>
    %4 = vector.broadcast %2 : vector<1x64xf32> to vector<8x64xf32>
    %5 = arith.addf %3, %4 : vector<8x64xf32>
    %cst_5 = arith.constant 0.000000e+00 : f32
    %6 = vector.broadcast %cst_5 : f32 to vector<8x64xf32>
    %7 = arith.maximumf %5, %6 : vector<8x64xf32>
    %c0_6 = arith.constant 0 : index
    %c0_7 = arith.constant 0 : index
    %8 = vector.load %arg4[%c0_6, %c0_7] : memref<64x64xf32, #tpu.memory_space<vmem>>, vector<64x64xf32>
    %c0_8 = arith.constant 0 : index
    %c0_9 = arith.constant 0 : index
    %9 = vector.load %arg5[%c0_8, %c0_9] : memref<1x64xf32, #tpu.memory_space<vmem>>, vector<1x64xf32>
    %cst_10 = arith.constant dense<0.000000e+00> : vector<8x64xf32>
    %10 = tpu.matmul %7, %8, %cst_10 {dimension_numbers = #tpu.dot_dimension_numbers<[1], [0], [0], [1], [0, 0, 1, 1], [], []>} : vector<8x64xf32>, vector<64x64xf32>, vector<8x64xf32> -> vector<8x64xf32>
    %11 = vector.broadcast %9 : vector<1x64xf32> to vector<8x64xf32>
    %12 = arith.addf %10, %11 : vector<8x64xf32>
    %cst_11 = arith.constant 0.000000e+00 : f32
    %13 = vector.broadcast %cst_11 : f32 to vector<8x64xf32>
    %14 = arith.maximumf %12, %13 : vector<8x64xf32>
    %c0_12 = arith.constant 0 : index
    %c0_13 = arith.constant 0 : index
    %15 = vector.load %arg6[%c0_12, %c0_13] : memref<64x8xf32, #tpu.memory_space<vmem>>, vector<64x8xf32>
    %c0_14 = arith.constant 0 : index
    %c0_15 = arith.constant 0 : index
    %16 = vector.load %arg7[%c0_14, %c0_15] : memref<1x8xf32, #tpu.memory_space<vmem>>, vector<1x8xf32>
    %cst_16 = arith.constant dense<0.000000e+00> : vector<8x8xf32>
    %17 = tpu.matmul %14, %15, %cst_16 {dimension_numbers = #tpu.dot_dimension_numbers<[1], [0], [0], [1], [0, 0, 1, 1], [], []>} : vector<8x64xf32>, vector<64x8xf32>, vector<8x8xf32> -> vector<8x8xf32>
    %18 = vector.broadcast %16 : vector<1x8xf32> to vector<8x8xf32>
    %19 = arith.addf %17, %18 : vector<8x8xf32>
    %c0_17 = arith.constant 0 : index
    %c0_18 = arith.constant 0 : index
    %20 = vector.load %arg8[%c0_17, %c0_18] : memref<8x8xf32, #tpu.memory_space<vmem>>, vector<8x8xf32>
    tpu.vector_store %arg8[%c0_17, %c0_18], %19 {strides = array<i32>} : memref<8x8xf32, #tpu.memory_space<vmem>>, vector<8x8xf32>,
    return
  }
  func.func @transform_0(%arg0: i32) -> (i32, i32) {
    %c0_i32 = arith.constant 0 : i32
    %c0_i32_0 = arith.constant 0 : i32
    return %arg0, %c0_i32 : i32, i32
  }
  func.func @transform_1(%arg0: i32) -> (i32, i32) {
    %c0_i32 = arith.constant 0 : i32
    %c0_i32_0 = arith.constant 0 : i32
    %c0_i32_1 = arith.constant 0 : i32
    return %c0_i32, %c0_i32_0 : i32, i32
  }
  func.func @transform_2(%arg0: i32) -> (i32, i32) {
    %c0_i32 = arith.constant 0 : i32
    %c0_i32_0 = arith.constant 0 : i32
    %c0_i32_1 = arith.constant 0 : i32
    return %c0_i32, %c0_i32_0 : i32, i32
  }
  func.func @transform_3(%arg0: i32) -> (i32, i32) {
    %c0_i32 = arith.constant 0 : i32
    %c0_i32_0 = arith.constant 0 : i32
    %c0_i32_1 = arith.constant 0 : i32
    return %c0_i32, %c0_i32_0 : i32, i32
  }
  func.func @transform_4(%arg0: i32) -> (i32, i32) {
    %c0_i32 = arith.constant 0 : i32
    %c0_i32_0 = arith.constant 0 : i32
    %c0_i32_1 = arith.constant 0 : i32
    return %c0_i32, %c0_i32_0 : i32, i32
  }
  func.func @transform_5(%arg0: i32) -> (i32, i32) {
    %c0_i32 = arith.constant 0 : i32
    %c0_i32_0 = arith.constant 0 : i32
    %c0_i32_1 = arith.constant 0 : i32
    return %c0_i32, %c0_i32_0 : i32, i32
  }
  func.func @transform_6(%arg0: i32) -> (i32, i32) {
    %c0_i32 = arith.constant 0 : i32
    %c0_i32_0 = arith.constant 0 : i32
    %c0_i32_1 = arith.constant 0 : i32
    return %c0_i32, %c0_i32_0 : i32, i32
  }
  func.func @transform_7(%arg0: i32) -> (i32, i32) {
    %c0_i32 = arith.constant 0 : i32
    %c0_i32_0 = arith.constant 0 : i32
    return %arg0, %c0_i32 : i32, i32
  }
}

</mosaic_0001>

<llo_original>
// kernel: mlp_forward.1
$region0: #{mlp_forward.1}
  #allocation0 [shape = 'u32[]', space=smem, size = 0x4, offset = 0x4, fixed_abs, tag = 'smem constant byte address 0x4 - core index']
  #allocation1 [shape = 'u32[144,128]{1,0:T(1,128)}', space=vmem, size = 0x12000, scoped, tag = 'internal scratch']
  %s0 = inlined_call_operand.vmem [shape: f32[8,32], index: 0, kind: input, shape index: {}]
  %s1 = inlined_call_operand.hbm [shape: f32[32,64], index: 1, kind: input, shape index: {}]
  %s2 = inlined_call_operand.vmem [shape: f32[1,64], index: 2, kind: input, shape index: {}, may-alias: {2,4}]
  %s3 = inlined_call_operand.hbm [shape: f32[64,64], index: 3, kind: input, shape index: {}]
  %s4 = inlined_call_operand.vmem [shape: f32[1,64], index: 4, kind: input, shape index: {}, may-alias: {2,4}]
  %s5 = inlined_call_operand.hbm [shape: f32[64,8], index: 5, kind: input, shape index: {}]
  %s6 = inlined_call_operand.vmem [shape: f32[1,8], index: 6, kind: input, shape index: {}]
  %s7 = inlined_call_operand.vmem [shape: f32[8,8], index: 7, kind: output, shape index: {}]
  %s8 = sld [smem:[#allocation0]]
  $region50: #{mlp_forward.1} parent=0
    _
  %s10 = ssub.s32 1, %s8
  %s11 = scalar_select 0, %s10, %s8
  $region1: #{mlp_forward.1} parent=0
    #allocation2 [shape = 'u8[16384]{0}', space=vmem, size = 0x4000, scoped, tag = 'input window, operand 1, single buffered']
    #allocation3 [shape = 's32[1]{0}', space=sflag, size = 0x4, scoped, tag = 'scoped memory for mlp_forward.1']
    #allocation4 [shape = 'u8[32768]{0}', space=vmem, size = 0x8000, scoped, tag = 'input window, operand 3, single buffered']
    #allocation5 [shape = 's32[1]{0}', space=sflag, size = 0x4, scoped, tag = 'scoped memory for mlp_forward.1']
    #allocation6 [shape = 'u8[32768]{0}', space=vmem, size = 0x8000, scoped, tag = 'input window, operand 5, single buffered']
    %12 = vsyncpa [#allocation3], 0
    %13 = vsyncpa [#allocation5], 0
    // Predicated region
    $region2: #{mlp_forward.1} parent=1 // pred_check
      _
    $region3: #{mlp_forward.1} parent=1 // pred_check_branch
      %15 = sbr.rel (0) target = $region5
    $region4: #{mlp_forward.1} parent=1 // pred_region
      _
    $region5: #{mlp_forward.1} parent=1 // pred_fallthru
      _
    // Predicated region
    $region6: #{mlp_forward.1} parent=1 // pred_check
      _
    $region7: #{mlp_forward.1} parent=1 // pred_check_branch
      %17 = sbr.rel (0) target = $region9
    $region8: #{mlp_forward.1} parent=1 // pred_region
      %s19 = ssub.s32 512, 512
      %20 = vsyncadd [#allocation3], %s19
      %s21 = sshll.u32 [#allocation2], 4
      %s22 = int_to_ptr.vmem [resolvable:$true] %s21
      %27 = dma.hbm_to_vmem [thread:$0]  %s1, 512, %s22, [#allocation3], 128, 128, 8
    $region9: #{mlp_forward.1} parent=1 // pred_fallthru
      _
    // Predicated region
    $region10: #{mlp_forward.1} parent=1 // pred_check
      _
    $region11: #{mlp_forward.1} parent=1 // pred_check_branch
      %29 = sbr.rel (0) target = $region13
    $region12: #{mlp_forward.1} parent=1 // pred_region
      _
    $region13: #{mlp_forward.1} parent=1 // pred_fallthru
      _
    // Predicated region
    $region14: #{mlp_forward.1} parent=1 // pred_check
      _
    $region15: #{mlp_forward.1} parent=1 // pred_check_branch
      %31 = sbr.rel (0) target = $region17
    $region16: #{mlp_forward.1} parent=1 // pred_region
      %s33 = ssub.s32 1024, 1024
      %34 = vsyncadd [#allocation5], %s33
      %s35 = sshll.u32 [#allocation4], 4
      %s36 = int_to_ptr.vmem [resolvable:$true] %s35
      %41 = dma.hbm_to_vmem [thread:$0]  %s3, 1024, %s36, [#allocation5], 128, 128, 8
    $region17: #{mlp_forward.1} parent=1 // pred_fallthru
      _
    // Predicated region
    $region18: #{mlp_forward.1} parent=1 // pred_check
      _
    $region19: #{mlp_forward.1} parent=1 // pred_check_branch
      %43 = sbr.rel (0) target = $region21
    $region20: #{mlp_forward.1} parent=1 // pred_region
      _
    $region21: #{mlp_forward.1} parent=1 // pred_fallthru
      _
    // Predicated region
    $region22: #{mlp_forward.1} parent=1 // pred_check
      _
    $region23: #{mlp_forward.1} parent=1 // pred_check_branch
      %45 = sbr.rel (0) target = $region25
    $region24: #{mlp_forward.1} parent=1 // pred_region
      %s47 = ssub.s32 1024, 1024
      %48 = vsyncadd [#allocation5], %s47
      %s49 = sshll.u32 [#allocation6], 4
      %s50 = int_to_ptr.vmem [resolvable:$true] %s49
      %55 = dma.hbm_to_vmem [thread:$0]  %s5, 1024, %s50, [#allocation5], 128, 128, 8
    $region25: #{mlp_forward.1} parent=1 // pred_fallthru
      _
    // Predicated region
    $region26: #{mlp_forward.1} parent=1 // pred_check
      _
    $region27: #{mlp_forward.1} parent=1 // pred_check_branch
      %57 = sbr.rel (0) target = $region29
    $region28: #{mlp_forward.1} parent=1 // pred_region
      _
    $region29: #{mlp_forward.1} parent=1 // pred_fallthru
      _
    // Predicated region
    $region30: #{mlp_forward.1} parent=1 // pred_check
      _
    $region31: #{mlp_forward.1} parent=1 // pred_check_branch
      %59 = sbr.rel (0) target = $region33
    $region32: #{mlp_forward.1} parent=1 // pred_region
      %60 = dma.done [#allocation3], 512
    $region33: #{mlp_forward.1} parent=1 // pred_fallthru
      _
    // Predicated region
    $region34: #{mlp_forward.1} parent=1 // pred_check
      _
    $region35: #{mlp_forward.1} parent=1 // pred_check_branch
      %62 = sbr.rel (0) target = $region37
    $region36: #{mlp_forward.1} parent=1 // pred_region
      %63 = dma.done [#allocation5], 1024
    $region37: #{mlp_forward.1} parent=1 // pred_fallthru
      _
    // Predicated region
    $region38: #{mlp_forward.1} parent=1 // pred_check
      _
    $region39: #{mlp_forward.1} parent=1 // pred_check_branch
      %65 = sbr.rel (0) target = $region41
    $region40: #{mlp_forward.1} parent=1 // pred_region
      %66 = dma.done [#allocation5], 1024
    $region41: #{mlp_forward.1} parent=1 // pred_fallthru
      _
    %v67 = vld [vmem:[%s0] sm:$0xff]
    %v68 = vld [vmem:[#allocation2] sm:$0xff]
    %v69 = vld [vmem:[#allocation2 + $0x8] sm:$0xff]
    %v70 = vld [vmem:[#allocation2 + $0x10] sm:$0xff]
    %v71 = vld [vmem:[#allocation2 + $0x18] sm:$0xff]
    %v72 = vld [vmem:[%s2] sm:$0x1]
    %v74 = vlaneseq
    %v75 = vshrl.u32 %v74, 7
    %v76 = vsub.s32 0, %v75
    %v77 = vrot.slane %v72, %v76
    %vm79 = vcmask 261120
    %v81 = vsel %vm79, %v67, 0
    %83 = vmatprep.subr.mxu0 0.0
    %84 = vmatpush1.msra.mxu0 0.0
    %85 = vmatprep.subr.mxu0 0.0
    %86 = vmatpush1.msra.mxu0 0.0
    %87 = vmatprep.subr.mxu0 0.0
    %88 = vmatpush1.msra.mxu0 0.0
    %89 = vmatprep.subr.mxu0 0.0
    %90 = vmatpush1.msra.mxu0 0.0
    %91 = vmatprep.subr.mxu0 0.0
    %92 = vmatpush1.msra.mxu0 0.0
    %93 = vmatprep.subr.mxu0 0.0
    %94 = vmatpush1.msra.mxu0 0.0
    %95 = vmatprep.subr.mxu0 0.0
    %96 = vmatpush1.msra.mxu0 0.0
    %97 = vmatprep.subr.mxu0 0.0
    %98 = vmatpush1.msra.mxu0 0.0
    %99 = vmatprep.subr.mxu0 0.0
    %100 = vmatpush1.msra.mxu0 0.0
    %101 = vmatprep.subr.mxu0 0.0
    %102 = vmatpush1.msra.mxu0 0.0
    %103 = vmatprep.subr.mxu0 0.0
    %104 = vmatpush1.msra.mxu0 0.0
    %105 = vmatprep.subr.mxu0 0.0
    %106 = vmatpush1.msra.mxu0 0.0
    %107 = vmatprep.subr.mxu0 0.0
    %108 = vmatpush1.msra.mxu0 %v71
    %109 = vmatprep.subr.mxu0 0.0
    %110 = vmatpush1.msra.mxu0 %v70
    %111 = vmatprep.subr.mxu0 0.0
    %112 = vmatpush1.msra.mxu0 %v69
    %113 = vmatprep.subr.mxu0 0.0
    %114 = vmatpush1.msra.mxu0 %v68
    %115 = vmatprep.subr.mxu0 0.0
    %116 = vmatpush2.msra.mxu0 0.0
    %117 = vmatprep.subr.mxu0 0.0
    %118 = vmatpush2.msra.mxu0 0.0
    %119 = vmatprep.subr.mxu0 0.0
    %120 = vmatpush2.msra.mxu0 0.0
    %121 = vmatprep.subr.mxu0 0.0
    %122 = vmatpush2.msra.mxu0 0.0
    %123 = vmatprep.subr.mxu0 0.0
    %124 = vmatpush2.msra.mxu0 0.0
    %125 = vmatprep.subr.mxu0 0.0
    %126 = vmatpush2.msra.mxu0 0.0
    %127 = vmatprep.subr.mxu0 0.0
    %128 = vmatpush2.msra.mxu0 0.0
    %129 = vmatprep.subr.mxu0 0.0
    %130 = vmatpush2.msra.mxu0 0.0
    %131 = vmatprep.subr.mxu0 0.0
    %132 = vmatpush2.msra.mxu0 0.0
    %133 = vmatprep.subr.mxu0 0.0
    %134 = vmatpush2.msra.mxu0 0.0
    %135 = vmatprep.subr.mxu0 0.0
    %136 = vmatpush2.msra.mxu0 0.0
    %137 = vmatprep.subr.mxu0 0.0
    %138 = vmatpush2.msra.mxu0 0.0
    %139 = vmatprep.subr.mxu0 0.0
    %140 = vmatpush2.msra.mxu0 0.0
    %141 = vmatprep.subr.mxu0 0.0
    %142 = vmatpush2.msra.mxu0 0.0
    %143 = vmatprep.subr.mxu0 0.0
    %144 = vmatpush2.msra.mxu0 0.0
    %145 = vmatprep.subr.mxu0 0.0
    %146 = vmatpush2.msra.mxu0 0.0
    %147 = vmatprep.mubr.f32.mxu0 0.0
    %148 = vmatmul.mubr.f32.gmra.mxu0 %v81
    %v149 = vpop.f32.mrf.mxu0
    %v150 = vadd.f32 %v77, %v149
    %v151 = vpop.f32.mrf.mxu0
    %152 = vdwg.mxu0
    %v153 = vmax.f32 %v150, 0.0
    %v154 = vld [vmem:[#allocation4] sm:$0xff]
    %v155 = vld [vmem:[#allocation4 + $0x8] sm:$0xff]
    %v156 = vld [vmem:[#allocation4 + $0x10] sm:$0xff]
    %v157 = vld [vmem:[#allocation4 + $0x18] sm:$0xff]
    %v158 = vld [vmem:[#allocation4 + $0x20] sm:$0xff]
    %v159 = vld [vmem:[#allocation4 + $0x28] sm:$0xff]
    %v160 = vld [vmem:[#allocation4 + $0x30] sm:$0xff]
    %v161 = vld [vmem:[#allocation4 + $0x38] sm:$0xff]
    %v162 = vld [vmem:[%s4] sm:$0x1]
    %v164 = vlaneseq
    %v165 = vshrl.u32 %v164, 7
    %v166 = vsub.s32 0, %v165
    %v167 = vrot.slane %v162, %v166
    %vm169 = vcmask 523264
    %v171 = vsel %vm169, %v153, 0
    %173 = vmatprep.subr.mxu0 0.0
    %174 = vmatpush1.msra.mxu0 0.0
    %175 = vmatprep.subr.mxu0 0.0
    %176 = vmatpush1.msra.mxu0 0.0
    %177 = vmatprep.subr.mxu0 0.0
    %178 = vmatpush1.msra.mxu0 0.0
    %179 = vmatprep.subr.mxu0 0.0
    %180 = vmatpush1.msra.mxu0 0.0
    %181 = vmatprep.subr.mxu0 0.0
    %182 = vmatpush1.msra.mxu0 0.0
    %183 = vmatprep.subr.mxu0 0.0
    %184 = vmatpush1.msra.mxu0 0.0
    %185 = vmatprep.subr.mxu0 0.0
    %186 = vmatpush1.msra.mxu0 0.0
    %187 = vmatprep.subr.mxu0 0.0
    %188 = vmatpush1.msra.mxu0 0.0
    %189 = vmatprep.subr.mxu0 0.0
    %190 = vmatpush1.msra.mxu0 %v161
    %191 = vmatprep.subr.mxu0 0.0
    %192 = vmatpush1.msra.mxu0 %v160
    %193 = vmatprep.subr.mxu0 0.0
    %194 = vmatpush1.msra.mxu0 %v159
    %195 = vmatprep.subr.mxu0 0.0
    %196 = vmatpush1.msra.mxu0 %v158
    %197 = vmatprep.subr.mxu0 0.0
    %198 = vmatpush1.msra.mxu0 %v157
    %199 = vmatprep.subr.mxu0 0.0
    %200 = vmatpush1.msra.mxu0 %v156
    %201 = vmatprep.subr.mxu0 0.0
    %202 = vmatpush1.msra.mxu0 %v155
    %203 = vmatprep.subr.mxu0 0.0
    %204 = vmatpush1.msra.mxu0 %v154
    %205 = vmatprep.subr.mxu0 0.0
    %206 = vmatpush2.msra.mxu0 0.0
    %207 = vmatprep.subr.mxu0 0.0
    %208 = vmatpush2.msra.mxu0 0.0
    %209 = vmatprep.subr.mxu0 0.0
    %210 = vmatpush2.msra.mxu0 0.0
    %211 = vmatprep.subr.mxu0 0.0
    %212 = vmatpush2.msra.mxu0 0.0
    %213 = vmatprep.subr.mxu0 0.0
    %214 = vmatpush2.msra.mxu0 0.0
    %215 = vmatprep.subr.mxu0 0.0
    %216 = vmatpush2.msra.mxu0 0.0
    %217 = vmatprep.subr.mxu0 0.0
    %218 = vmatpush2.msra.mxu0 0.0
    %219 = vmatprep.subr.mxu0 0.0
    %220 = vmatpush2.msra.mxu0 0.0
    %221 = vmatprep.subr.mxu0 0.0
    %222 = vmatpush2.msra.mxu0 0.0
    %223 = vmatprep.subr.mxu0 0.0
    %224 = vmatpush2.msra.mxu0 0.0
    %225 = vmatprep.subr.mxu0 0.0
    %226 = vmatpush2.msra.mxu0 0.0
    %227 = vmatprep.subr.mxu0 0.0
    %228 = vmatpush2.msra.mxu0 0.0
    %229 = vmatprep.subr.mxu0 0.0
    %230 = vmatpush2.msra.mxu0 0.0
    %231 = vmatprep.subr.mxu0 0.0
    %232 = vmatpush2.msra.mxu0 0.0
    %233 = vmatprep.subr.mxu0 0.0
    %234 = vmatpush2.msra.mxu0 0.0
    %235 = vmatprep.subr.mxu0 0.0
    %236 = vmatpush2.msra.mxu0 0.0
    %237 = vmatprep.mubr.f32.mxu0 0.0
    %238 = vmatmul.mubr.f32.gmra.mxu0 %v171
    %v239 = vpop.f32.mrf.mxu0
    %v240 = vadd.f32 %v167, %v239
    %v241 = vpop.f32.mrf.mxu0
    %242 = vdwg.mxu0
    %v243 = vmax.f32 %v240, 0.0
    %v244 = vld [vmem:[#allocation6] sm:$0xff]
    %v245 = vld [vmem:[#allocation6 + $0x8] sm:$0xff]
    %v246 = vld [vmem:[#allocation6 + $0x10] sm:$0xff]
    %v247 = vld [vmem:[#allocation6 + $0x18] sm:$0xff]
    %v248 = vld [vmem:[#allocation6 + $0x20] sm:$0xff]
    %v249 = vld [vmem:[#allocation6 + $0x28] sm:$0xff]
    %v250 = vld [vmem:[#allocation6 + $0x30] sm:$0xff]
    %v251 = vld [vmem:[#allocation6 + $0x38] sm:$0xff]
    %v252 = vld [vmem:[%s6] sm:$0x1]
    %v254 = vlaneseq
    %v255 = vshrl.u32 %v254, 7
    %v256 = vsub.s32 0, %v255
    %v257 = vrot.slane %v252, %v256
    %v260 = vsel %vm169, %v243, 0
    %262 = vmatprep.subr.mxu0 0.0
    %263 = vmatpush1.msra.mxu0 0.0
    %264 = vmatprep.subr.mxu0 0.0
    %265 = vmatpush1.msra.mxu0 0.0
    %266 = vmatprep.subr.mxu0 0.0
    %267 = vmatpush1.msra.mxu0 0.0
    %268 = vmatprep.subr.mxu0 0.0
    %269 = vmatpush1.msra.mxu0 0.0
    %270 = vmatprep.subr.mxu0 0.0
    %271 = vmatpush1.msra.mxu0 0.0
    %272 = vmatprep.subr.mxu0 0.0
    %273 = vmatpush1.msra.mxu0 0.0
    %274 = vmatprep.subr.mxu0 0.0
    %275 = vmatpush1.msra.mxu0 0.0
    %276 = vmatprep.subr.mxu0 0.0
    %277 = vmatpush1.msra.mxu0 0.0
    %278 = vmatprep.subr.mxu0 0.0
    %279 = vmatpush1.msra.mxu0 %v251
    %280 = vmatprep.subr.mxu0 0.0
    %281 = vmatpush1.msra.mxu0 %v250
    %282 = vmatprep.subr.mxu0 0.0
    %283 = vmatpush1.msra.mxu0 %v249
    %284 = vmatprep.subr.mxu0 0.0
    %285 = vmatpush1.msra.mxu0 %v248
    %286 = vmatprep.subr.mxu0 0.0
    %287 = vmatpush1.msra.mxu0 %v247
    %288 = vmatprep.subr.mxu0 0.0
    %289 = vmatpush1.msra.mxu0 %v246
    %290 = vmatprep.subr.mxu0 0.0
    %291 = vmatpush1.msra.mxu0 %v245
    %292 = vmatprep.subr.mxu0 0.0
    %293 = vmatpush1.msra.mxu0 %v244
    %294 = vmatprep.subr.mxu0 0.0
    %295 = vmatpush2.msra.mxu0 0.0
    %296 = vmatprep.subr.mxu0 0.0
    %297 = vmatpush2.msra.mxu0 0.0
    %298 = vmatprep.subr.mxu0 0.0
    %299 = vmatpush2.msra.mxu0 0.0
    %300 = vmatprep.subr.mxu0 0.0
    %301 = vmatpush2.msra.mxu0 0.0
    %302 = vmatprep.subr.mxu0 0.0
    %303 = vmatpush2.msra.mxu0 0.0
    %304 = vmatprep.subr.mxu0 0.0
    %305 = vmatpush2.msra.mxu0 0.0
    %306 = vmatprep.subr.mxu0 0.0
    %307 = vmatpush2.msra.mxu0 0.0
    %308 = vmatprep.subr.mxu0 0.0
    %309 = vmatpush2.msra.mxu0 0.0
    %310 = vmatprep.subr.mxu0 0.0
    %311 = vmatpush2.msra.mxu0 0.0
    %312 = vmatprep.subr.mxu0 0.0
    %313 = vmatpush2.msra.mxu0 0.0
    %314 = vmatprep.subr.mxu0 0.0
    %315 = vmatpush2.msra.mxu0 0.0
    %316 = vmatprep.subr.mxu0 0.0
    %317 = vmatpush2.msra.mxu0 0.0
    %318 = vmatprep.subr.mxu0 0.0
    %319 = vmatpush2.msra.mxu0 0.0
    %320 = vmatprep.subr.mxu0 0.0
    %321 = vmatpush2.msra.mxu0 0.0
    %322 = vmatprep.subr.mxu0 0.0
    %323 = vmatpush2.msra.mxu0 0.0
    %324 = vmatprep.subr.mxu0 0.0
    %325 = vmatpush2.msra.mxu0 0.0
    %326 = vmatprep.mubr.f32.mxu0 0.0
    %327 = vmatmul.mubr.f32.gmra.mxu0 %v260
    %v328 = vpop.f32.mrf.mxu0
    %v329 = vadd.f32 %v257, %v328
    %v330 = vpop.f32.mrf.mxu0
    %331 = vdwg.mxu0
    %vm332 = vcmask 64512
    %333 = vst.msk [vmem:[%s7] sm:$0xff] %vm332, %v329
    // Predicated region
    $region42: #{mlp_forward.1} parent=1 // pred_check
      _
    $region43: #{mlp_forward.1} parent=1 // pred_check_branch
      %335 = sbr.rel (0) target = $region45
    $region44: #{mlp_forward.1} parent=1 // pred_region
      _
    $region45: #{mlp_forward.1} parent=1 // pred_fallthru
      _
    // Predicated region
    $region46: #{mlp_forward.1} parent=1 // pred_check
      _
    $region47: #{mlp_forward.1} parent=1 // pred_check_branch
      %337 = sbr.rel (0) target = $region49
    $region48: #{mlp_forward.1} parent=1 // pred_region
      _
    $region49: #{mlp_forward.1} parent=1 // pred_fallthru
      _
    %338 = vsyncpa [#allocation3], 1
    %339 = vsyncpa [#allocation5], 1

</llo_original>
